<compile_context>
chip_gen: v6e
topology: v6e:2x2x1
jax: 0.10.0
libtpu: 0.0.40
codegen_flags: <defaults>
</compile_context>

<pallas_src>
import functools

import jax
import jax.numpy as jnp
from jax.experimental import pallas as pl
from jax.experimental.pallas import tpu as pltpu


def _pick_tile_n(n_flat, de, itemsize, budget_bytes=4 * 1024 * 1024):
    """Largest multiple of 128 dividing n_flat with one E tile under budget."""
    if n_flat % 128 != 0:
        return n_flat                       # can't tile cleanly; take whole axis
    max_elems = max(budget_bytes // (de * itemsize), 128)
    tile = min(n_flat, (max_elems // 128) * 128)
    tile = max(tile, 128)
    while n_flat % tile != 0:               # shrink to a divisor of n_flat
        tile -= 128
    return max(tile, 128)


def _etoy_kernel(e_ref, w_ref, b_ref, o_ref,
                 sum_ref, sq_ref, min_ref, max_ref, *, n_total):
    """One grid step over one (batch, spatial-tile) pair.

    e_ref:   (1, de, TILE_N)  lane-dense E tile (cast to f32 here)
    w_ref:   (4, de, dy)      linear weight split into 4 stat blocks (resident)
    b_ref:   (1, dy)          bias (resident)
    o_ref:   (1, 1, dy)       output row for this batch element
    scratch: (de, 1) f32      running sum / sum-of-squares / min / max
    """
    k = pl.program_id(1)
    nk = pl.num_programs(1)

    @pl.when(k == 0)
    def _init():
        sum_ref[...] = jnp.zeros(sum_ref.shape, jnp.float32)
        sq_ref[...] = jnp.zeros(sq_ref.shape, jnp.float32)
        min_ref[...] = jnp.full(min_ref.shape, jnp.inf, jnp.float32)
        max_ref[...] = jnp.full(max_ref.shape, -jnp.inf, jnp.float32)

    # Single streaming pass over this tile (lane-dense reductions).
    e = e_ref[0].astype(jnp.float32)                       # (de, TILE_N)
    sum_ref[...] += jnp.sum(e, axis=-1, keepdims=True)
    sq_ref[...] += jnp.sum(e * e, axis=-1, keepdims=True)
    min_ref[...] = jnp.minimum(min_ref[...], jnp.min(e, axis=-1, keepdims=True))
    max_ref[...] = jnp.maximum(max_ref[...], jnp.max(e, axis=-1, keepdims=True))

    @pl.when(k == nk - 1)
    def _finalize():
        n = jnp.float32(n_total)
        s = sum_ref[...]
        mean = s / n
        # Single-pass unbiased variance; clamp against cancellation error.
        var = (sq_ref[...] - s * s / n) / jnp.float32(n_total - 1)
        std = jnp.sqrt(jnp.maximum(var, 0.0))

        def _contract(stat_col, w_blk):                    # (de,1),(de,dy)->(1,dy)
            return jnp.sum(stat_col * w_blk, axis=0, keepdims=True)

        out = (_contract(mean, w_ref[0])
               + _contract(min_ref[...], w_ref[1])
               + _contract(max_ref[...], w_ref[2])
               + _contract(std, w_ref[3])
               + b_ref[...])                               # (1, dy)
        o_ref[0] = out.astype(o_ref.dtype)


def etoy_forward(E, W, b, *, tile_n=None):
    """E: (bs, n, n, de), W: (4*de, dy), b: (dy,) -> (bs, dy)."""
    bs, n, n2, de = E.shape
    assert n == n2
    four_de, dy = W.shape
    assert four_de == 4 * de
    n_flat = n * n
    assert n_flat >= 2, "unbiased std needs n*n >= 2"

    # Lane-dense layout: reduction axis (n*n) minor, tiny de on sublanes.
    e_t = jnp.transpose(E, (0, 3, 1, 2)).reshape(bs, de, n_flat)
    w4 = W.astype(jnp.float32).reshape(4, de, dy)
    b2 = b.astype(jnp.float32).reshape(1, dy)

    if tile_n is None:
        tile_n = _pick_tile_n(n_flat, de, e_t.dtype.itemsize)
    assert n_flat % tile_n == 0
    assert tile_n == n_flat or tile_n % 128 == 0
    grid = (bs, n_flat // tile_n)

    kernel = functools.partial(_etoy_kernel, n_total=n_flat)

    out3 = pl.pallas_call(
        kernel,
        out_shape=jax.ShapeDtypeStruct((bs, 1, dy), jnp.float32),
        grid_spec=pltpu.PrefetchScalarGridSpec(
            num_scalar_prefetch=0,
            grid=grid,
            in_specs=[
                # E tile: streamed, double-buffered by the pipeline.
                pl.BlockSpec((1, de, tile_n), lambda b_, k: (b_, 0, k)),
                # W / bias: constant index_map -> DMA'd once, stay resident.
                pl.BlockSpec((4, de, dy), lambda b_, k: (0, 0, 0)),
                pl.BlockSpec((1, dy), lambda b_, k: (0, 0)),
            ],
            out_specs=pl.BlockSpec((1, 1, dy), lambda b_, k: (b_, 0, 0)),
            scratch_shapes=[pltpu.VMEM((de, 1), jnp.float32)] * 4,
        ),
        compiler_params=pltpu.CompilerParams(
            dimension_semantics=("parallel", "arbitrary")),
    )(e_t, w4, b2)
    return out3.reshape(bs, dy)


def etoy_reference(E, W, b):
    """Pure-JAX reference matching the PyTorch forward."""
    bs, n, _, de = E.shape
    ef = E.reshape(bs, n * n, de).astype(jnp.float32)
    m = jnp.mean(ef, axis=1)
    mi = jnp.min(ef, axis=1)
    ma = jnp.max(ef, axis=1)
    std = jnp.std(ef, axis=1, ddof=1)
    z = jnp.concatenate([m, mi, ma, std], axis=-1)
    return z @ W.astype(jnp.float32) + b.astype(jnp.float32)


if __name__ == "__main__":
    # Small shapes consistent with the module: E: (bs, n, n, de).
    # n=16 -> n*n=256 = 2 x 128, so tile_n=128 exercises the multi-step
    # init / accumulate / finalize accumulator path.
    bs, n, de, dy = 2, 16, 4, 8

    key = jax.random.PRNGKey(0)
    k_e, k_w, k_b = jax.random.split(key, 3)

    E = jax.random.normal(k_e, (bs, n, n, de), dtype=jnp.float32)
    # Deterministic "nn.Linear(4*de, dy)" params (synthetic, not a checkpoint).
    W = jax.random.normal(k_w, (4 * de, dy), dtype=jnp.float32) * 0.1
    b = jax.random.normal(k_b, (dy,), dtype=jnp.float32) * 0.1

    out = etoy_forward(E, W, b, tile_n=128)
    jax.block_until_ready(out)

    ref = etoy_reference(E, W, b)
    assert out.shape == (bs, dy)
    assert jnp.allclose(out, ref, atol=1e-4, rtol=1e-4), "mismatch vs reference"

    # Also check the auto-tile path (single step per batch).
    out2 = etoy_forward(E, W, b)
    jax.block_until_ready(out2)
    assert jnp.allclose(out2, ref, atol=1e-4, rtol=1e-4), "mismatch (auto tile)"

    print("KERNEL_OK")
</pallas_src>

<mosaic_0001>
module attributes {stable_mosaic.version = 11 : i64} {
  func.func @_etoy_kernel(%arg0: i32, %arg1: i32, %arg2: memref<1x4x128xf32, #tpu.memory_space<vmem>>, %arg3: memref<4x4x8xf32, #tpu.memory_space<vmem>>, %arg4: memref<1x8xf32, #tpu.memory_space<vmem>>, %arg5: memref<1x1x8xf32, #tpu.memory_space<vmem>>, %arg6: memref<4x1xf32, #tpu.memory_space<vmem>>, %arg7: memref<4x1xf32, #tpu.memory_space<vmem>>, %arg8: memref<4x1xf32, #tpu.memory_space<vmem>>, %arg9: memref<4x1xf32, #tpu.memory_space<vmem>>) attributes {dimension_semantics = [#tpu.dimension_semantics<parallel>, #tpu.dimension_semantics<arbitrary>], iteration_bounds = array<i64: 2, 2>, scalar_prefetch = 0 : i64, scratch_operands = 4 : i64, tpu.core_type = #tpu.core_type<tc>, window_params = [{transform_indices = @transform_0, window_bounds = array<i64: 1, 4, 128>}, {pipeline_mode = #tpu.pipeline_mode<synchronous>, transform_indices = @transform_1, window_bounds = array<i64: 4, 4, 8>}, {pipeline_mode = #tpu.pipeline_mode<synchronous>, transform_indices = @transform_2, window_bounds = array<i64: 1, 8>}, {transform_indices = @transform_3, window_bounds = array<i64: 1, 1, 8>}]} {
    %c0_i32 = arith.constant 0 : i32
    %0 = arith.cmpi eq, %arg1, %c0_i32 : i32
    %1 = arith.extui %0 : i1 to i32
    %c0_i32_0 = arith.constant 0 : i32
    %2 = arith.cmpi ne, %1, %c0_i32_0 : i32
    scf.if %2 {
      %cst_23 = arith.constant 0.000000e+00 : f32
      %29 = vector.broadcast %cst_23 : f32 to vector<4x1xf32>
      %c0_24 = arith.constant 0 : index
      %c0_25 = arith.constant 0 : index
      %30 = vector.load %arg6[%c0_24, %c0_25] : memref<4x1xf32, #tpu.memory_space<vmem>>, vector<4x1xf32>
      tpu.vector_store %arg6[%c0_24, %c0_25], %29 {strides = array<i32>} : memref<4x1xf32, #tpu.memory_space<vmem>>, vector<4x1xf32>,
      %cst_26 = arith.constant 0.000000e+00 : f32
      %31 = vector.broadcast %cst_26 : f32 to vector<4x1xf32>
      %c0_27 = arith.constant 0 : index
      %c0_28 = arith.constant 0 : index
      %32 = vector.load %arg7[%c0_27, %c0_28] : memref<4x1xf32, #tpu.memory_space<vmem>>, vector<4x1xf32>
      tpu.vector_store %arg7[%c0_27, %c0_28], %31 {strides = array<i32>} : memref<4x1xf32, #tpu.memory_space<vmem>>, vector<4x1xf32>,
      %cst_29 = arith.constant 0x7F800000 : f32
      %33 = vector.broadcast %cst_29 : f32 to vector<4x1xf32>
      %c0_30 = arith.constant 0 : index
      %c0_31 = arith.constant 0 : index
      %34 = vector.load %arg8[%c0_30, %c0_31] : memref<4x1xf32, #tpu.memory_space<vmem>>, vector<4x1xf32>
      tpu.vector_store %arg8[%c0_30, %c0_31], %33 {strides = array<i32>} : memref<4x1xf32, #tpu.memory_space<vmem>>, vector<4x1xf32>,
      %cst_32 = arith.constant 0xFF800000 : f32
      %35 = vector.broadcast %cst_32 : f32 to vector<4x1xf32>
      %c0_33 = arith.constant 0 : index
      %c0_34 = arith.constant 0 : index
      %36 = vector.load %arg9[%c0_33, %c0_34] : memref<4x1xf32, #tpu.memory_space<vmem>>, vector<4x1xf32>
      tpu.vector_store %arg9[%c0_33, %c0_34], %35 {strides = array<i32>} : memref<4x1xf32, #tpu.memory_space<vmem>>, vector<4x1xf32>,
    } else {
    }
    %c0 = arith.constant 0 : index
    %c0_1 = arith.constant 0 : index
    %c0_2 = arith.constant 0 : index
    %3 = vector.load %arg2[%c0, %c0_1, %c0_2] : memref<1x4x128xf32, #tpu.memory_space<vmem>>, vector<1x4x128xf32>
    %4 = vector.shape_cast %3 : vector<1x4x128xf32> to vector<4x128xf32>
    %c0_3 = arith.constant 0 : index
    %c0_4 = arith.constant 0 : index
    %5 = vector.load %arg6[%c0_3, %c0_4] : memref<4x1xf32, #tpu.memory_space<vmem>>, vector<4x1xf32>
    %cst = arith.constant dense<0.000000e+00> : vector<4xf32>
    %6 = vector.multi_reduction <add>, %4, %cst [1] : vector<4x128xf32> to vector<4xf32>
    %7 = vector.shape_cast %6 : vector<4xf32> to vector<4x1xf32>
    %8 = arith.addf %5, %7 : vector<4x1xf32>
    %c0_5 = arith.constant 0 : index
    %c0_6 = arith.constant 0 : index
    %9 = vector.load %arg6[%c0_5, %c0_6] : memref<4x1xf32, #tpu.memory_space<vmem>>, vector<4x1xf32>
    tpu.vector_store %arg6[%c0_5, %c0_6], %8 {strides = array<i32>} : memref<4x1xf32, #tpu.memory_space<vmem>>, vector<4x1xf32>,
    %c0_7 = arith.constant 0 : index
    %c0_8 = arith.constant 0 : index
    %10 = vector.load %arg7[%c0_7, %c0_8] : memref<4x1xf32, #tpu.memory_space<vmem>>, vector<4x1xf32>
    %11 = arith.mulf %4, %4 : vector<4x128xf32>
    %cst_9 = arith.constant dense<0.000000e+00> : vector<4xf32>
    %12 = vector.multi_reduction <add>, %11, %cst_9 [1] : vector<4x128xf32> to vector<4xf32>
    %13 = vector.shape_cast %12 : vector<4xf32> to vector<4x1xf32>
    %14 = arith.addf %10, %13 : vector<4x1xf32>
    %c0_10 = arith.constant 0 : index
    %c0_11 = arith.constant 0 : index
    %15 = vector.load %arg7[%c0_10, %c0_11] : memref<4x1xf32, #tpu.memory_space<vmem>>, vector<4x1xf32>
    tpu.vector_store %arg7[%c0_10, %c0_11], %14 {strides = array<i32>} : memref<4x1xf32, #tpu.memory_space<vmem>>, vector<4x1xf32>,
    %c0_12 = arith.constant 0 : index
    %c0_13 = arith.constant 0 : index
    %16 = vector.load %arg8[%c0_12, %c0_13] : memref<4x1xf32, #tpu.memory_space<vmem>>, vector<4x1xf32>
    %cst_14 = arith.constant dense<0x7F800000> : vector<4xf32>
    %17 = vector.multi_reduction <minimumf>, %4, %cst_14 [1] : vector<4x128xf32> to vector<4xf32>
    %18 = vector.shape_cast %17 : vector<4xf32> to vector<4x1xf32>
    %19 = arith.minimumf %16, %18 : vector<4x1xf32>
    %c0_15 = arith.constant 0 : index
    %c0_16 = arith.constant 0 : index
    %20 = vector.load %arg8[%c0_15, %c0_16] : memref<4x1xf32, #tpu.memory_space<vmem>>, vector<4x1xf32>
    tpu.vector_store %arg8[%c0_15, %c0_16], %19 {strides = array<i32>} : memref<4x1xf32, #tpu.memory_space<vmem>>, vector<4x1xf32>,
    %c0_17 = arith.constant 0 : index
    %c0_18 = arith.constant 0 : index
    %21 = vector.load %arg9[%c0_17, %c0_18] : memref<4x1xf32, #tpu.memory_space<vmem>>, vector<4x1xf32>
    %cst_19 = arith.constant dense<0xFF800000> : vector<4xf32>
    %22 = vector.multi_reduction <maximumf>, %4, %cst_19 [1] : vector<4x128xf32> to vector<4xf32>
    %23 = vector.shape_cast %22 : vector<4xf32> to vector<4x1xf32>
    %24 = arith.maximumf %21, %23 : vector<4x1xf32>
    %c0_20 = arith.constant 0 : index
    %c0_21 = arith.constant 0 : index
    %25 = vector.load %arg9[%c0_20, %c0_21] : memref<4x1xf32, #tpu.memory_space<vmem>>, vector<4x1xf32>
    tpu.vector_store %arg9[%c0_20, %c0_21], %24 {strides = array<i32>} : memref<4x1xf32, #tpu.memory_space<vmem>>, vector<4x1xf32>,
    %c1_i32 = arith.constant 1 : i32
    %26 = arith.cmpi eq, %arg1, %c1_i32 : i32
    %27 = arith.extui %26 : i1 to i32
    %c0_i32_22 = arith.constant 0 : i32
    %28 = arith.cmpi ne, %27, %c0_i32_22 : i32
    scf.if %28 {
      %c0_23 = arith.constant 0 : index
      %c0_24 = arith.constant 0 : index
      %29 = vector.load %arg6[%c0_23, %c0_24] : memref<4x1xf32, #tpu.memory_space<vmem>>, vector<4x1xf32>
      %cst_25 = arith.constant 2.560000e+02 : f32
      %30 = vector.broadcast %cst_25 : f32 to vector<4x1xf32>
      %31 = arith.divf %29, %30 : vector<4x1xf32>
      %c0_26 = arith.constant 0 : index
      %c0_27 = arith.constant 0 : index
      %32 = vector.load %arg7[%c0_26, %c0_27] : memref<4x1xf32, #tpu.memory_space<vmem>>, vector<4x1xf32>
      %33 = arith.mulf %29, %29 : vector<4x1xf32>
      %cst_28 = arith.constant 2.560000e+02 : f32
      %34 = vector.broadcast %cst_28 : f32 to vector<4x1xf32>
      %35 = arith.divf %33, %34 : vector<4x1xf32>
      %36 = arith.subf %32, %35 : vector<4x1xf32>
      %cst_29 = arith.constant 2.550000e+02 : f32
      %37 = vector.broadcast %cst_29 : f32 to vector<4x1xf32>
      %38 = arith.divf %36, %37 : vector<4x1xf32>
      %cst_30 = arith.constant 0.000000e+00 : f32
      %39 = vector.broadcast %cst_30 : f32 to vector<4x1xf32>
      %40 = arith.maximumf %38, %39 : vector<4x1xf32>
      %41 = math.sqrt %40 : vector<4x1xf32>
      %c0_31 = arith.constant 0 : index
      %c0_32 = arith.constant 0 : index
      %c0_33 = arith.constant 0 : index
      %42 = vector.load %arg3[%c0_31, %c0_32, %c0_33] : memref<4x4x8xf32, #tpu.memory_space<vmem>>, vector<1x4x8xf32>
      %43 = vector.shape_cast %42 : vector<1x4x8xf32> to vector<4x8xf32>
      %44 = vector.broadcast %31 : vector<4x1xf32> to vector<4x8xf32>
      %45 = arith.mulf %44, %43 : vector<4x8xf32>
      %cst_34 = arith.constant dense<0.000000e+00> : vector<8xf32>
      %46 = vector.multi_reduction <add>, %45, %cst_34 [0] : vector<4x8xf32> to vector<8xf32>
      %47 = vector.shape_cast %46 : vector<8xf32> to vector<1x8xf32>
      %c0_35 = arith.constant 0 : index
      %c0_36 = arith.constant 0 : index
      %48 = vector.load %arg8[%c0_35, %c0_36] : memref<4x1xf32, #tpu.memory_space<vmem>>, vector<4x1xf32>
      %c1 = arith.constant 1 : index
      %c0_37 = arith.constant 0 : index
      %c0_38 = arith.constant 0 : index
      %49 = vector.load %arg3[%c1, %c0_37, %c0_38] : memref<4x4x8xf32, #tpu.memory_space<vmem>>, vector<1x4x8xf32>
      %50 = vector.shape_cast %49 : vector<1x4x8xf32> to vector<4x8xf32>
      %51 = vector.broadcast %48 : vector<4x1xf32> to vector<4x8xf32>
      %52 = arith.mulf %51, %50 : vector<4x8xf32>
      %cst_39 = arith.constant dense<0.000000e+00> : vector<8xf32>
      %53 = vector.multi_reduction <add>, %52, %cst_39 [0] : vector<4x8xf32> to vector<8xf32>
      %54 = vector.shape_cast %53 : vector<8xf32> to vector<1x8xf32>
      %55 = arith.addf %47, %54 : vector<1x8xf32>
      %c0_40 = arith.constant 0 : index
      %c0_41 = arith.constant 0 : index
      %56 = vector.load %arg9[%c0_40, %c0_41] : memref<4x1xf32, #tpu.memory_space<vmem>>, vector<4x1xf32>
      %c2 = arith.constant 2 : index
      %c0_42 = arith.constant 0 : index
      %c0_43 = arith.constant 0 : index
      %57 = vector.load %arg3[%c2, %c0_42, %c0_43] : memref<4x4x8xf32, #tpu.memory_space<vmem>>, vector<1x4x8xf32>
      %58 = vector.shape_cast %57 : vector<1x4x8xf32> to vector<4x8xf32>
      %59 = vector.broadcast %56 : vector<4x1xf32> to vector<4x8xf32>
      %60 = arith.mulf %59, %58 : vector<4x8xf32>
      %cst_44 = arith.constant dense<0.000000e+00> : vector<8xf32>
      %61 = vector.multi_reduction <add>, %60, %cst_44 [0] : vector<4x8xf32> to vector<8xf32>
      %62 = vector.shape_cast %61 : vector<8xf32> to vector<1x8xf32>
      %63 = arith.addf %55, %62 : vector<1x8xf32>
      %c3 = arith.constant 3 : index
      %c0_45 = arith.constant 0 : index
      %c0_46 = arith.constant 0 : index
      %64 = vector.load %arg3[%c3, %c0_45, %c0_46] : memref<4x4x8xf32, #tpu.memory_space<vmem>>, vector<1x4x8xf32>
      %65 = vector.shape_cast %64 : vector<1x4x8xf32> to vector<4x8xf32>
      %66 = vector.broadcast %41 : vector<4x1xf32> to vector<4x8xf32>
      %67 = arith.mulf %66, %65 : vector<4x8xf32>
      %cst_47 = arith.constant dense<0.000000e+00> : vector<8xf32>
      %68 = vector.multi_reduction <add>, %67, %cst_47 [0] : vector<4x8xf32> to vector<8xf32>
      %69 = vector.shape_cast %68 : vector<8xf32> to vector<1x8xf32>
      %70 = arith.addf %63, %69 : vector<1x8xf32>
      %c0_48 = arith.constant 0 : index
      %c0_49 = arith.constant 0 : index
      %71 = vector.load %arg4[%c0_48, %c0_49] : memref<1x8xf32, #tpu.memory_space<vmem>>, vector<1x8xf32>
      %72 = arith.addf %70, %71 : vector<1x8xf32>
      %c0_50 = arith.constant 0 : index
      %c0_51 = arith.constant 0 : index
      %c0_52 = arith.constant 0 : index
      %73 = vector.load %arg5[%c0_50, %c0_51, %c0_52] : memref<1x1x8xf32, #tpu.memory_space<vmem>>, vector<1x1x8xf32>
      %74 = vector.shape_cast %73 : vector<1x1x8xf32> to vector<1x8xf32>
      %75 = vector.shape_cast %72 : vector<1x8xf32> to vector<1x1x8xf32>
      tpu.vector_store %arg5[%c0_50, %c0_51, %c0_52], %75 {strides = array<i32>} : memref<1x1x8xf32, #tpu.memory_space<vmem>>, vector<1x1x8xf32>,
    } else {
    }
    return
  }
  func.func @transform_0(%arg0: i32, %arg1: i32) -> (i32, i32, i32) {
    %c0_i32 = arith.constant 0 : i32
    %c0_i32_0 = arith.constant 0 : i32
    return %arg0, %c0_i32, %arg1 : i32, i32, i32
  }
  func.func @transform_1(%arg0: i32, %arg1: i32) -> (i32, i32, i32) {
    %c0_i32 = arith.constant 0 : i32
    %c0_i32_0 = arith.constant 0 : i32
    %c0_i32_1 = arith.constant 0 : i32
    %c0_i32_2 = arith.constant 0 : i32
    return %c0_i32, %c0_i32_0, %c0_i32_1 : i32, i32, i32
  }
  func.func @transform_2(%arg0: i32, %arg1: i32) -> (i32, i32) {
    %c0_i32 = arith.constant 0 : i32
    %c0_i32_0 = arith.constant 0 : i32
    %c0_i32_1 = arith.constant 0 : i32
    return %c0_i32, %c0_i32_0 : i32, i32
  }
  func.func @transform_3(%arg0: i32, %arg1: i32) -> (i32, i32, i32) {
    %c0_i32 = arith.constant 0 : i32
    %c0_i32_0 = arith.constant 0 : i32
    %c0_i32_1 = arith.constant 0 : i32
    return %arg0, %c0_i32, %c0_i32_0 : i32, i32, i32
  }
}

</mosaic_0001>

<llo_original>
// kernel: tpu_custom_call.1
$region0: #{tpu_custom_call.1}
  #allocation0 [shape = 'u32[]', space=smem, size = 0x4, offset = 0x4, fixed_abs, tag = 'smem constant byte address 0x4 - core index']
  #allocation1 [shape = 'u32[144,128]{1,0:T(1,128)}', space=vmem, size = 0x12000, scoped, tag = 'internal scratch']
  #allocation2 [shape = 'f32[4,1]{1,0:T(4,128)}', space=vmem, size = 0x800, scoped, tag = 'scratch operand']
  #allocation3 [shape = 'f32[4,1]{1,0:T(4,128)}', space=vmem, size = 0x800, scoped, tag = 'scratch operand']
  #allocation4 [shape = 'f32[4,1]{1,0:T(4,128)}', space=vmem, size = 0x800, scoped, tag = 'scratch operand']
  #allocation5 [shape = 'f32[4,1]{1,0:T(4,128)}', space=vmem, size = 0x800, scoped, tag = 'scratch operand']
  %s0 = inlined_call_operand.hbm [shape: f32[2,4,256], index: 0, kind: input, shape index: {}]
  %s1 = inlined_call_operand.hbm [shape: f32[4,4,8], index: 1, kind: input, shape index: {}]
  %s2 = inlined_call_operand.vmem [shape: f32[1,8], index: 2, kind: input, shape index: {}]
  %s3 = inlined_call_operand.hbm [shape: f32[2,1,8], index: 3, kind: output, shape index: {}]
  %s4 = sld [smem:[#allocation0]]
  $region61: #{tpu_custom_call.1} parent=0
    _
  %s6 = ssub.s32 1, %s4
  %s7 = scalar_select 0, %s6, %s4
  $region1: #{tpu_custom_call.1} parent=0
    #allocation6 [shape = 'u8[4096]{0}', space=vmem, size = 0x1000, scoped, tag = 'input window, operand 0']
    #allocation7 [shape = 's32[2]{0}', space=sflag, size = 0x8, scoped, tag = 'scoped memory for tpu_custom_call.1']
    #allocation8 [shape = 's32[2]{0}', space=sflag, size = 0x8, scoped, tag = 'scoped memory for tpu_custom_call.1']
    #allocation9 [shape = 'u8[8192]{0}', space=vmem, size = 0x2000, scoped, tag = 'input window, operand 1, single buffered']
    #allocation10 [shape = 's32[1]{0}', space=sflag, size = 0x4, scoped, tag = 'scoped memory for tpu_custom_call.1']
    #allocation11 [shape = 'u8[1024]{0}', space=vmem, size = 0x400, scoped, tag = 'output window, operand 0']
    %8 = vsyncpa [#allocation7], 0
    %s9 = scalar_lea.sflag [#allocation7], 1
    %10 = vsyncpa %s9, 0
    %11 = vsyncpa [#allocation10], 0
    %12 = vsyncpa [#allocation8], 0
    %s13 = scalar_lea.sflag [#allocation8], 1
    %14 = vsyncpa %s13, 0
    loop: start=0, step=1, limit=6
    $region2: #{tpu_custom_call.1} parent=1 // loop_pre_header
      _
    $region3: #{tpu_custom_call.1} parent=1 // loop_header
      %s16 = sphi 0, %s20
      %p17 = scmp.ge.s32.totalorder %s16, 6
      %s23 = sphi 0, %s35
      %s24 = sphi 0, %s31
      %s25 = sphi 0, %s23
      %s26 = sphi 0, %s24
      %s27 = sphi 0, %s25
      %s28 = sphi 0, %s26
      %s40 = sphi 0, %s42
      %s43 = sphi 0, %s40
      %s44 = sphi 0, %s43
      %s60 = sphi 0, %s44
      %s64 = sphi 0, %s64
      %s66 = sphi 0, %s64
      %s67 = sphi 0, %s66
      %s81 = sphi 0, %s67
      %s85 = sphi 0, %s85
      %s87 = sphi 0, %s85
      %s88 = sphi 0, %s87
      %s102 = sphi 0, %s88
      %s108 = sphi 0, %s110
      %s111 = sphi 0, %s108
      %s112 = sphi 0, %s111
      %s128 = sphi 0, %s112
    $region4: #{tpu_custom_call.1} parent=1 // loop_header_branch
      %19 = sbr.rel (%p17) target = $region8
    $region5: #{tpu_custom_call.1} parent=1 // loop_body
      %s21 = ssub.s32 %s16, 1
      %s22 = ssub.s32 %s16, 2
      %s29 = sadd.s32 1, %s24
      %p30 = scmp.ge.s32.totalorder %s29, 2
      %s31 = scalar_select %p30, 0, %s29
      %s32 = sadd.s32 1, %s23
      %s33 = scalar_select %p30, %s32, %s23
      %p34 = scmp.ge.s32.totalorder %s33, 2
      %s35 = scalar_select %p34, 0, %s33
      %s36 = ssub.s32 %s23, %s35
      %s37 = ssub.s32 %s24, %s31
      %s38 = sor.u32 %s36, %s37
      %p39 = scmp.eq.s32.totalorder %s38, 0
      %s41 = sadd.s32 %s40, 1
      %s42 = scalar_select %p39, %s40, %s41
      %p45 = pneg %p39
      %p46 = scmp.eq.s32.totalorder %s16, 3
      %p47 = por %p45, %p46
      %p48 = scmp.ne.s32.totalorder %s40, %s43
      %p49 = scmp.eq.s32.totalorder %s16, 0
      %p50 = por %p48, %p49
      %p51 = scmp.ne.s32.totalorder %s40, %s43
      %p52 = scmp.eq.s32.totalorder %s21, 3
      %p53 = por %p51, %p52
      %p54 = scmp.ne.s32.totalorder %s43, %s44
      %p55 = scmp.eq.s32.totalorder %s21, 0
      %p56 = por %p54, %p55
      %p57 = scmp.ne.s32.totalorder %s43, %s44
      %p58 = scmp.eq.s32.totalorder %s22, 3
      %p59 = por %p57, %p58
      %p61 = scmp.ne.s32.totalorder %s44, %s60
      %p62 = scmp.eq.s32.totalorder %s22, 0
      %p63 = por %p61, %p62
      %s65 = sadd.s32 %s64, 1
      %p68 = scmp.eq.s32.totalorder %s16, 3
      %p69 = scmp.ne.s32.totalorder %s64, %s66
      %p70 = scmp.eq.s32.totalorder %s16, 0
      %p71 = por %p69, %p70
      %p72 = scmp.ne.s32.totalorder %s64, %s66
      %p73 = scmp.eq.s32.totalorder %s21, 3
      %p74 = por %p72, %p73
      %p75 = scmp.ne.s32.totalorder %s66, %s67
      %p76 = scmp.eq.s32.totalorder %s21, 0
      %p77 = por %p75, %p76
      %p78 = scmp.ne.s32.totalorder %s66, %s67
      %p79 = scmp.eq.s32.totalorder %s22, 3
      %p80 = por %p78, %p79
      %p82 = scmp.ne.s32.totalorder %s67, %s81
      %p83 = scmp.eq.s32.totalorder %s22, 0
      %p84 = por %p82, %p83
      %s86 = sadd.s32 %s85, 1
      %p89 = scmp.eq.s32.totalorder %s16, 3
      %p90 = scmp.ne.s32.totalorder %s85, %s87
      %p91 = scmp.eq.s32.totalorder %s16, 0
      %p92 = por %p90, %p91
      %p93 = scmp.ne.s32.totalorder %s85, %s87
      %p94 = scmp.eq.s32.totalorder %s21, 3
      %p95 = por %p93, %p94
      %p96 = scmp.ne.s32.totalorder %s87, %s88
      %p97 = scmp.eq.s32.totalorder %s21, 0
      %p98 = por %p96, %p97
      %p99 = scmp.ne.s32.totalorder %s87, %s88
      %p100 = scmp.eq.s32.totalorder %s22, 3
      %p101 = por %p99, %p100
      %p103 = scmp.ne.s32.totalorder %s88, %s102
      %p104 = scmp.eq.s32.totalorder %s22, 0
      %p105 = por %p103, %p104
      %s106 = ssub.s32 %s23, %s35
      %p107 = scmp.eq.s32.totalorder %s106, 0
      %s109 = sadd.s32 %s108, 1
      %s110 = scalar_select %p107, %s108, %s109
      %p113 = pneg %p107
      %p114 = scmp.eq.s32.totalorder %s16, 3
      %p115 = por %p113, %p114
      %p116 = scmp.ne.s32.totalorder %s108, %s111
      %p117 = scmp.eq.s32.totalorder %s16, 0
      %p118 = por %p116, %p117
      %p119 = scmp.ne.s32.totalorder %s108, %s111
      %p120 = scmp.eq.s32.totalorder %s21, 3
      %p121 = por %p119, %p120
      %p122 = scmp.ne.s32.totalorder %s111, %s112
      %p123 = scmp.eq.s32.totalorder %s21, 0
      %p124 = por %p122, %p123
      %p125 = scmp.ne.s32.totalorder %s111, %s112
      %p126 = scmp.eq.s32.totalorder %s22, 3
      %p127 = por %p125, %p126
      %p129 = scmp.ne.s32.totalorder %s112, %s128
      %p130 = scmp.eq.s32.totalorder %s22, 0
      %p131 = por %p129, %p130
      %p132 = scmp.le.s32.totalorder 1, %s16
      %p133 = scmp.lt.s32.totalorder %s16, 5
      %p134 = pnand %p132, %p133
      %p135 = pneg %p134
      // Predicated region
      $region9: #{tpu_custom_call.1} parent=5 // pred_check
        _
      $region10: #{tpu_custom_call.1} parent=5 // pred_check_branch
        %137 = sbr.rel (%p134) target = $region12
      $region11: #{tpu_custom_call.1} parent=5 // pred_region
        %s138 = ssub.s32 %s16, 1
        // Predicated region
        $region13: #{tpu_custom_call.1} parent=11 // pred_check
          %p139 = pneg %p77
        $region14: #{tpu_custom_call.1} parent=11 // pred_check_branch
          %141 = sbr.rel (%p139) target = $region16
        $region15: #{tpu_custom_call.1} parent=11 // pred_region
          %s143 = ssub.s32 256, 256
          %144 = vsyncadd [#allocation10], %s143
          %s145 = sshll.u32 [#allocation9], 4
          %s146 = int_to_ptr.vmem [resolvable:$true] %s145
          %151 = dma.hbm_to_vmem [thread:$0]  %s1, 256, %s146, [#allocation10], 64, 64, 4
        $region16: #{tpu_custom_call.1} parent=11 // pred_fallthru
          _
        // Predicated region
        $region17: #{tpu_custom_call.1} parent=11 // pred_check
          %p152 = pneg %p98
        $region18: #{tpu_custom_call.1} parent=11 // pred_check_branch
          %154 = sbr.rel (%p152) target = $region20
        $region19: #{tpu_custom_call.1} parent=11 // pred_region
          _
        $region20: #{tpu_custom_call.1} parent=11 // pred_fallthru
          _
      $region12: #{tpu_custom_call.1} parent=5 // pred_fallthru
        _
      %p155 = scmp.lt.s32.totalorder %s16, 4
      // Predicated region
      $region21: #{tpu_custom_call.1} parent=5 // pred_check
        %p156 = pneg %p155
      $region22: #{tpu_custom_call.1} parent=5 // pred_check_branch
        %158 = sbr.rel (%p156) target = $region24
      $region23: #{tpu_custom_call.1} parent=5 // pred_region
        // Predicated region
        $region25: #{tpu_custom_call.1} parent=23 // pred_check
          %p159 = pneg %p50
        $region26: #{tpu_custom_call.1} parent=23 // pred_check_branch
          %161 = sbr.rel (%p159) target = $region28
        $region27: #{tpu_custom_call.1} parent=23 // pred_region
          %s162 = sand.u32 %s40, 1
          %s163 = scalar_lea.sflag [#allocation7], %s162
          %s164 = sand.u32 %s40, 1
          %s165 = smul.addr %s164, 4
          %s166 = scalar_lea.vmem [#allocation6], %s165
          %s168 = ssub.s32 64, 64
          %169 = vsyncadd %s163, %s168
          %s170 = smul.addr %s23, 2
          %s171 = sadd.s32 %s24, %s170
          %s172 = smul.addr %s171, 64
          %s173 = scalar_lea.hbm %s0, %s172
          %s175 = sshll.u32 %s166, 4
          %s176 = int_to_ptr.vmem [resolvable:$true] %s175
          %178 = dma.hbm_to_vmem [thread:$0]  %s173, 64, %s176, %s163
        $region28: #{tpu_custom_call.1} parent=23 // pred_fallthru
          _
      $region24: #{tpu_custom_call.1} parent=5 // pred_fallthru
        _
      %p179 = scmp.le.s32.totalorder 1, %s16
      %p180 = scmp.lt.s32.totalorder %s16, 5
      %p181 = pnand %p179, %p180
      %p182 = pneg %p181
      // Predicated region
      $region29: #{tpu_custom_call.1} parent=5 // pred_check
        _
      $region30: #{tpu_custom_call.1} parent=5 // pred_check_branch
        %184 = sbr.rel (%p181) target = $region32
      $region31: #{tpu_custom_call.1} parent=5 // pred_region
        %s185 = ssub.s32 %s16, 1
        %s186 = sand.u32 %s43, 1
        %s187 = scalar_lea.sflag [#allocation7], %s186
        %s188 = sand.u32 %s43, 1
        %s189 = smul.addr %s188, 4
        %s190 = scalar_lea.vmem [#allocation6], %s189
        // Predicated region
        $region33: #{tpu_custom_call.1} parent=31 // pred_check
          %p191 = pneg %p56
        $region34: #{tpu_custom_call.1} parent=31 // pred_check_branch
          %193 = sbr.rel (%p191) target = $region36
        $region35: #{tpu_custom_call.1} parent=31 // pred_region
          %194 = dma.done %s187, 64
        $region36: #{tpu_custom_call.1} parent=31 // pred_fallthru
          _
        // Predicated region
        $region37: #{tpu_custom_call.1} parent=31 // pred_check
          %p195 = pneg %p77
        $region38: #{tpu_custom_call.1} parent=31 // pred_check_branch
          %197 = sbr.rel (%p195) target = $region40
        $region39: #{tpu_custom_call.1} parent=31 // pred_region
          %198 = dma.done [#allocation10], 256
        $region40: #{tpu_custom_call.1} parent=31 // pred_fallthru
          _
        %s199 = sand.u32 %s43, 1
        %s200 = scalar_lea.sflag [#allocation7], %s199
        %s201 = sand.u32 %s43, 1
        %s202 = smul.addr %s201, 4
        %s203 = scalar_lea.vmem [#allocation6], %s202
        %p204 = pneg %p56
        %p205 = pneg %p53
        %p206 = pneg %p77
        %p207 = pneg %p74
        %p208 = pneg %p98
        %p209 = pneg %p95
        %p210 = pneg %p124
        %p211 = pneg %p121
        %s212 = sand.u32 %s111, 1
        %s213 = scalar_lea.sflag [#allocation8], %s212
        %s214 = sand.u32 %s111, 1
        %s215 = scalar_lea.vmem [#allocation11], %s214
        %p216 = scmp.eq.s32.totalorder %s26, 0
        // Predicated region
        $region41: #{tpu_custom_call.1} parent=31 // pred_check
          %p217 = pneg %p216
        $region42: #{tpu_custom_call.1} parent=31 // pred_check_branch
          %219 = sbr.rel (%p217) target = $region44
        $region43: #{tpu_custom_call.1} parent=31 // pred_region
          %vm220 = vcmask 3072
          %221 = vst.msk [vmem:[#allocation2] sm:$0xf] %vm220, 0.0
          %222 = vst.msk [vmem:[#allocation3] sm:$0xf] %vm220, 0.0
          %223 = vst.msk [vmem:[#allocation4] sm:$0xf] %vm220, inf
          %224 = vst.msk [vmem:[#allocation5] sm:$0xf] %vm220, -inf
        $region44: #{tpu_custom_call.1} parent=31 // pred_fallthru
          _
        %v225 = vld [vmem:[%s190] sm:$0xf]
        %v226 = vld [vmem:[#allocation2] sm:$0xf]
        %vm227 = vcmask 1043456
        %v228 = vsel %vm227, %v225, 0.0
        %229 = vadd.xlane.f32.xlu0 %v228
        %v230 = vpop.xlane.xlu0 %229
        %v231 = vadd.f32 %v226, %v230
        %vm232 = vcmask 3072
        %233 = vst.msk [vmem:[#allocation2] sm:$0xf] %vm232, %v231
        %v234 = vld [vmem:[#allocation3] sm:$0xf]
        %v235 = vmul.f32 %v225, %v225
        %v236 = vsel %vm227, %v235, 0.0
        %237 = vadd.xlane.f32.xlu0 %v236
        %v238 = vpop.xlane.xlu0 %237
        %v239 = vadd.f32 %v234, %v238
        %240 = vst.msk [vmem:[#allocation3] sm:$0xf] %vm232, %v239
        %v241 = vld [vmem:[#allocation4] sm:$0xf]
        %v242 = vsel %vm227, %v225, inf
        %243 = vmin.xlane.f32.xlu0 %v242
        %v244 = vpop.xlane.xlu0 %243
        %v245 = vmin.f32 %v241, %v244
        %246 = vst.msk [vmem:[#allocation4] sm:$0xf] %vm232, %v245
        %v247 = vld [vmem:[#allocation5] sm:$0xf]
        %v248 = vsel %vm227, %v225, -inf
        %249 = vmax.xlane.f32.xlu0 %v248
        %v250 = vpop.xlane.xlu0 %249
        %v251 = vmax.f32 %v247, %v250
        %252 = vst.msk [vmem:[#allocation5] sm:$0xf] %vm232, %v251
        %p253 = scmp.eq.s32.totalorder %s26, 1
        // Predicated region
        $region45: #{tpu_custom_call.1} parent=31 // pred_check
          %p254 = pneg %p253
        $region46: #{tpu_custom_call.1} parent=31 // pred_check_branch
          %256 = sbr.rel (%p254) target = $region48
        $region47: #{tpu_custom_call.1} parent=31 // pred_region
          %v257 = vld [vmem:[#allocation2] sm:$0xf]
          %v258 = vrcp.pop 256.0
          %v259 = vmul.f32 %v257, %v258
          %v260 = vld [vmem:[#allocation3] sm:$0xf]
          %v261 = vmul.f32 %v257, %v257
          %v262 = vmul.f32 %v261, %v258
          %v263 = vsub.f32 %v260, %v262
          %v264 = vrcp.pop 255.0
          %v265 = vmul.f32 %v263, %v264
          %v266 = vmax.f32 %v265, 0.0
          %v267 = vrsqrt.pop %v266
          %v268 = vmul.f32 %v266, %v267
          %vm269 = vcmp.eq.f32.partialorder %v266, inf
          %v270 = vsel %vm269, %v266, %v268
          %vm271 = vcmp.eq.f32.partialorder %v266, 0.0
          %v272 = vand.u32 %v266, 2147483648
          %v273 = vsel %vm271, %v272, %v270
          %v274 = vld [vmem:[#allocation9] sm:$0xf]
          %276 = vset.pattern.permute.xlu0 0
          %277 = vperm.xlu0 %276, %v259
          %v278 = vpop.permute.xlu0 %277
          %v280 = vmul.f32 %v278, %v274
          %vm281 = vcmask 60416
          %v282 = vsel %vm281, %v280, 0.0
          %v283 = vrot.slane %v282, 4
          %v284 = vadd.f32 %v282, %v283
          %v285 = vrot.slane %v284, 2
          %v286 = vadd.f32 %v284, %v285
          %v287 = vrot.slane %v286, 1
          %v288 = vadd.f32 %v286, %v287
          %v289 = vld [vmem:[#allocation4] sm:$0xf]
          %s290 = scalar_lea.vmem [#allocation9], 4
          %v291 = vld [vmem:[%s290] sm:$0xf]
          %293 = vset.pattern.permute.xlu0 0
          %294 = vperm.xlu0 %293, %v289
          %v295 = vpop.permute.xlu0 %294
          %v297 = vmul.f32 %v295, %v291
          %v298 = vsel %vm281, %v297, 0.0
          %v299 = vrot.slane %v298, 4
          %v300 = vadd.f32 %v298, %v299
          %v301 = vrot.slane %v300, 2
          %v302 = vadd.f32 %v300, %v301
          %v303 = vrot.slane %v302, 1
          %v304 = vadd.f32 %v302, %v303
          %v305 = vadd.f32 %v288, %v304
          %v306 = vld [vmem:[#allocation5] sm:$0xf]
          %s307 = scalar_lea.vmem [#allocation9], 8
          %v308 = vld [vmem:[%s307] sm:$0xf]
          %310 = vset.pattern.permute.xlu0 0
          %311 = vperm.xlu0 %310, %v306
          %v312 = vpop.permute.xlu0 %311
          %v314 = vmul.f32 %v312, %v308
          %v315 = vsel %vm281, %v314, 0.0
          %v316 = vrot.slane %v315, 4
          %v317 = vadd.f32 %v315, %v316
          %v318 = vrot.slane %v317, 2
          %v319 = vadd.f32 %v317, %v318
          %v320 = vrot.slane %v319, 1
          %v321 = vadd.f32 %v319, %v320
          %v322 = vadd.f32 %v305, %v321
          %s323 = scalar_lea.vmem [#allocation9], 12
          %v324 = vld [vmem:[%s323] sm:$0xf]
          %326 = vset.pattern.permute.xlu0 0
          %327 = vperm.xlu0 %326, %v273
          %v328 = vpop.permute.xlu0 %327
          %v330 = vmul.f32 %v328, %v324
          %v331 = vsel %vm281, %v330, 0.0
          %v332 = vrot.slane %v331, 4
          %v333 = vadd.f32 %v331, %v332
          %v334 = vrot.slane %v333, 2
          %v335 = vadd.f32 %v333, %v334
          %v336 = vrot.slane %v335, 1
          %v337 = vadd.f32 %v335, %v336
          %v338 = vadd.f32 %v322, %v337
          %v339 = vld [vmem:[%s2] sm:$0x1]
          %v340 = vadd.f32 %v338, %v339
          %vm341 = vcmask 57344
          %342 = vst.msk [vmem:[%s215] sm:$0x1] %vm341, %v340
        $region48: #{tpu_custom_call.1} parent=31 // pred_fallthru
          _
        %s343 = sand.u32 %s111, 1
        %s344 = scalar_lea.sflag [#allocation8], %s343
        %s345 = sand.u32 %s111, 1
        %s346 = scalar_lea.vmem [#allocation11], %s345
        // Predicated region
        $region49: #{tpu_custom_call.1} parent=31 // pred_check
          %p347 = pneg %p121
        $region50: #{tpu_custom_call.1} parent=31 // pred_check_branch
          %349 = sbr.rel (%p347) target = $region52
        $region51: #{tpu_custom_call.1} parent=31 // pred_region
          %s351 = ssub.s32 16, 16
          %352 = vsyncadd %s344, %s351
          %s353 = smul.addr %s25, 16
          %s354 = scalar_lea.hbm %s3, %s353
          %s356 = sshll.u32 %s346, 4
          %s357 = int_to_ptr.vmem [resolvable:$true] %s356
          %359 = dma.vmem_to_hbm [thread:$0]  %s357, 16, %s354, %s344
        $region52: #{tpu_custom_call.1} parent=31 // pred_fallthru
          _
      $region32: #{tpu_custom_call.1} parent=5 // pred_fallthru
        _
      %p360 = scmp.le.s32.totalorder 2, %s16
      // Predicated region
      $region53: #{tpu_custom_call.1} parent=5 // pred_check
        %p361 = pneg %p360
      $region54: #{tpu_custom_call.1} parent=5 // pred_check_branch
        %363 = sbr.rel (%p361) target = $region56
      $region55: #{tpu_custom_call.1} parent=5 // pred_region
        %s364 = ssub.s32 %s16, 2
        // Predicated region
        $region57: #{tpu_custom_call.1} parent=55 // pred_check
          %p365 = pneg %p127
        $region58: #{tpu_custom_call.1} parent=55 // pred_check_branch
          %367 = sbr.rel (%p365) target = $region60
        $region59: #{tpu_custom_call.1} parent=55 // pred_region
          %s368 = sand.u32 %s112, 1
          %s369 = scalar_lea.sflag [#allocation8], %s368
          %s370 = sand.u32 %s112, 1
          %s371 = scalar_lea.vmem [#allocation11], %s370
          %372 = dma.done %s369, 16
        $region60: #{tpu_custom_call.1} parent=55 // pred_fallthru
          _
      $region56: #{tpu_custom_call.1} parent=5 // pred_fallthru
        _
    $region6: #{tpu_custom_call.1} parent=1 // loop_footer
      %s20 = sadd.s32 1, %s16
    $region7: #{tpu_custom_call.1} parent=1 // loop_footer_branch
      %15 = sbr.rel target = $region3
    $region8: #{tpu_custom_call.1} parent=1 // loop_exit
      _
    %373 = vsyncpa [#allocation7], 1
    %s374 = scalar_lea.sflag [#allocation7], 1
    %375 = vsyncpa %s374, 1
    %376 = vsyncpa [#allocation10], 1
    %377 = vsyncpa [#allocation8], 1
    %s378 = scalar_lea.sflag [#allocation8], 1
    %379 = vsyncpa %s378, 1

</llo_original>
